<compile_context>
chip_gen: v5e
topology: v5e:2x2
jax: 0.10.0
libtpu: 0.0.40
codegen_flags: <defaults>
</compile_context>

<pallas_src>
import jax
import jax.numpy as jnp
from jax.experimental import pallas as pl
from jax.experimental.pallas import tpu as pltpu

# ----------------------------- model config ---------------------------------
B = 2            # batch
S = 8            # snapshots per sample (sequence axis)
D_DRONE = 4
D_RADIO = 12
D_IN = D_DRONE + D_RADIO     # d_input_feature = 16
D_HID = 32
D_EMBED = 32
N_LAYERS = 2
N_OUTPUTS = 8
LANES = 128

# parameter-slab row layout: every weight is a zero-padded (128, 128) block
R_W0 = 0                      # Linear(d_in, d_hid) weight   (rows 0:16, cols 0:32)
R_W1 = R_W0 + LANES           # skip-block 1 Linear, LN folded (rows 0:32, cols 0:32)
R_W2 = R_W1 + LANES           # skip-block 2 Linear, LN folded
R_WE = R_W2 + LANES           # Linear(d_hid, d_embed)
R_WO = R_WE + LANES           # lin_output Linear(d_embed, n_outputs) @ lane offset D_EMBED
R_B = R_WO + LANES            # 8 rows: biases + final LayerNorm params (128-wide)
SLAB_ROWS = R_B + 8           # 648 (multiple of 8)

_SELU_ALPHA = 1.6732632423543772848170429916717
_SELU_SCALE = 1.0507009873554804934193349852946
_LN_EPS = 1e-5


def _selu(x):
    return _SELU_SCALE * jnp.where(x > 0, x, _SELU_ALPHA * (jnp.exp(x) - 1.0))


def _ln_normalize(x, d):
    # x is (rows, 128) with real features in lanes [0, d) and zeros beyond, so
    # sums over all 128 lanes divided by the explicit divisor d give the exact
    # mean / E[x^2] of the d real features.
    s = jnp.sum(x, axis=-1, keepdims=True)
    sq = jnp.sum(x * x, axis=-1, keepdims=True)
    mean = s * (1.0 / d)
    # Biased var via E[x^2]-E[x]^2 (single pass; one fewer cross-lane reduce
    # than torch's E[(x-mean)^2]).  The max(.,0) clamp guards f32 cancellation
    # and the all-zero padded rows (var == 0) -> do NOT remove it.
    var = jnp.maximum(sq * (1.0 / d) - mean * mean, 0.0)
    return (x - mean) * jax.lax.rsqrt(var + _LN_EPS)


# ------------------------------- kernel -------------------------------------
def single_snapshot_kernel(x_ref, p_ref, out_ref):
    x = x_ref[...]                                       # (n_pad, 128)

    # embed_net[0:2]: Linear(d_in, d_hid) + SELU.  Input concat already done in
    # the wrapper slab; W0 is zero-padded to 128x128 so one lane-dense matmul.
    h = _selu(
        jnp.dot(x, p_ref[R_W0:R_W0 + LANES, :], preferred_element_type=jnp.float32)
        + p_ref[R_B + 0:R_B + 1, :])

    # n_layers x SkipConnection(LayerNorm -> Linear -> SELU); LN affine folded
    # into W/b at pack time.  Weight rows/cols beyond D_HID are zero, so the
    # non-zero padded lanes produced by _ln_normalize never leak forward.
    for r_w, r_b in ((R_W1, R_B + 1), (R_W2, R_B + 2)):
        y = _selu(
            jnp.dot(_ln_normalize(h, D_HID), p_ref[r_w:r_w + LANES, :],
                    preferred_element_type=jnp.float32)
            + p_ref[r_b:r_b + 1, :])
        h = y + h

    # Linear(d_hid, d_embed) + LayerNorm(d_embed)   (embedding is an output)
    e = (jnp.dot(h, p_ref[R_WE:R_WE + LANES, :], preferred_element_type=jnp.float32)
         + p_ref[R_B + 3:R_B + 4, :])
    e = _ln_normalize(e, D_EMBED) * p_ref[R_B + 4:R_B + 5, :] + p_ref[R_B + 5:R_B + 6, :]

    # lin_output: W/b stored at lane offset D_EMBED, so pred lands in lanes
    # [D_EMBED, D_EMBED+N_OUTPUTS).  Packed output = one VPU add + one
    # unmasked 128-wide store; no concatenate, no lane shuffles.
    pred = (jnp.dot(e, p_ref[R_WO:R_WO + LANES, :], preferred_element_type=jnp.float32)
            + p_ref[R_B + 6:R_B + 7, :])
    out_ref[...] = e + pred


# ------------------------------- wrapper -------------------------------------
def _vmem_spec():
    return pl.BlockSpec(memory_space=pltpu.MemorySpace.VMEM)


@jax.jit
def single_snapshot_net(x_dict, packed_params):
    drone_state = x_dict["drone_state"]
    radio_feature = x_dict["radio_feature"]
    b, s, _ = drone_state.shape
    n = b * s
    n_pad = ((n + 7) // 8) * 8                            # handle row tail safely

    xd = drone_state.reshape(n, D_DRONE)
    xr = radio_feature.reshape(n, D_RADIO)
    if xd.dtype != jnp.float32:
        xd = xd.astype(jnp.float32)
    if xr.dtype != jnp.float32:
        xr = xr.astype(jnp.float32)

    # One lane-dense (n_pad, 128) input slab: [drone(4) | radio(12) | zeros].
    # Single aligned input DMA instead of two narrow sub-lane ones.
    x = jnp.concatenate([xd, xr], axis=-1)
    x = jnp.pad(x, ((0, n_pad - n), (0, LANES - D_IN)))

    packed = pl.pallas_call(
        single_snapshot_kernel,
        out_shape=jax.ShapeDtypeStruct((n_pad, LANES), jnp.float32),
        in_specs=[_vmem_spec(), _vmem_spec()],
        out_specs=_vmem_spec(),
    )(x, packed_params)

    embed = packed[:n, :D_EMBED].reshape(b, s, D_EMBED)
    output = packed[:n, D_EMBED:D_EMBED + N_OUTPUTS].reshape(b, s, N_OUTPUTS)
    # snapshots_per_sample == 0 path of the PyTorch module.
    # TODO(synk): torch's output.isnan().any() breakpoint guard has no kernel
    # equivalent; dropout arg is unused in the module forward (no nn.Dropout).
    return {
        "drone_state": drone_state,
        "radio_feature": radio_feature,
        "single_snapshot_pred": output,
        "embedding": embed,
    }


# --------------------------- parameter creation ------------------------------
def make_params(key):
    """PyTorch-faithful parameter list (weights stored as (fan_in, fan_out))."""
    ks = jax.random.split(key, 16)
    k = iter(ks)

    def lin_w(kw, fan_in, fan_out):
        bound = 1.0 / jnp.sqrt(fan_in)
        return jax.random.uniform(kw, (fan_in, fan_out), jnp.float32, -bound, bound)

    def lin_b(kb, fan_in, fan_out):
        bound = 1.0 / jnp.sqrt(fan_in)
        return jax.random.uniform(kb, (1, fan_out), jnp.float32, -bound, bound)

    params = []
    params += [lin_w(next(k), D_IN, D_HID), lin_b(next(k), D_IN, D_HID)]
    for _ in range(N_LAYERS):
        params += [jnp.ones((1, D_HID), jnp.float32),      # LayerNorm weight
                   jnp.zeros((1, D_HID), jnp.float32)]      # LayerNorm bias
        params += [lin_w(next(k), D_HID, D_HID), lin_b(next(k), D_HID, D_HID)]
    params += [lin_w(next(k), D_HID, D_EMBED), lin_b(next(k), D_HID, D_EMBED)]
    params += [jnp.ones((1, D_EMBED), jnp.float32),
               jnp.zeros((1, D_EMBED), jnp.float32)]
    params += [lin_w(next(k), D_EMBED, N_OUTPUTS), lin_b(next(k), D_EMBED, N_OUTPUTS)]
    return params


def pack_params(params):
    """Fold skip-block LayerNorms into their Linears, zero-pad every tensor to
    the full 128-lane width, and pack everything into a single
    (SLAB_ROWS, 128) f32 slab (one VMEM-resident parameter DMA).
    NOTE: re-pack whenever parameters change (training / finetuning)."""
    (w0, b0,
     ln1w, ln1b, w1, b1,
     ln2w, ln2b, w2, b2,
     we, be, lnew, lneb,
     wo, bo) = params

    def fold(lnw, lnb, w, b):
        # LN(x) @ W + b == norm(x) @ (diag(lnw) @ W) + (b + lnb @ W)
        return lnw.reshape(-1, 1) * w, b + lnb @ w

    w1f, b1f = fold(ln1w, ln1b, w1, b1)
    w2f, b2f = fold(ln2w, ln2b, w2, b2)

    slab = jnp.zeros((SLAB_ROWS, LANES), jnp.float32)

    def put(sl, row, col, a):
        a = jnp.asarray(a, jnp.float32)
        a = a.reshape(-1, a.shape[-1])
        return sl.at[row:row + a.shape[0], col:col + a.shape[1]].set(a)

    slab = put(slab, R_W0, 0, w0)
    slab = put(slab, R_W1, 0, w1f)
    slab = put(slab, R_W2, 0, w2f)
    slab = put(slab, R_WE, 0, we)
    slab = put(slab, R_WO, D_EMBED, wo)      # lin_output weight @ lane offset 32
    slab = put(slab, R_B + 0, 0, b0)
    slab = put(slab, R_B + 1, 0, b1f)
    slab = put(slab, R_B + 2, 0, b2f)
    slab = put(slab, R_B + 3, 0, be)
    slab = put(slab, R_B + 4, 0, lnew)
    slab = put(slab, R_B + 5, 0, lneb)
    slab = put(slab, R_B + 6, D_EMBED, bo)   # lin_output bias @ lane offset 32
    return slab


# ----------------------------------- main ------------------------------------
if __name__ == "__main__":
    key = jax.random.PRNGKey(0)
    k_ds, k_rf, k_p = jax.random.split(key, 3)
    x_dict = {
        "drone_state": jax.random.normal(k_ds, (B, S, D_DRONE), jnp.float32),
        "radio_feature": jax.random.normal(k_rf, (B, S, D_RADIO), jnp.float32),
    }
    params = make_params(k_p)
    packed_params = jax.block_until_ready(pack_params(params))  # one-time packing

    out = single_snapshot_net(x_dict, packed_params)
    jax.block_until_ready(out)

    assert out["single_snapshot_pred"].shape == (B, S, N_OUTPUTS)
    assert out["embedding"].shape == (B, S, D_EMBED)
    assert not bool(jnp.isnan(out["single_snapshot_pred"]).any())
    assert not bool(jnp.isnan(out["embedding"]).any())
    print("KERNEL_OK")
</pallas_src>

<mosaic_0001>
module attributes {stable_mosaic.version = 11 : i64} {
  func.func @single_snapshot_kernel(%arg0: memref<16x128xf32, #tpu.memory_space<vmem>>, %arg1: memref<648x128xf32, #tpu.memory_space<vmem>>, %arg2: memref<16x128xf32, #tpu.memory_space<vmem>>) attributes {dimension_semantics = [], scalar_prefetch = 0 : i64, scratch_operands = 0 : i64, tpu.core_type = #tpu.core_type<tc>} {
    %c0 = arith.constant 0 : index
    %c0_0 = arith.constant 0 : index
    %0 = vector.load %arg0[%c0, %c0_0] : memref<16x128xf32, #tpu.memory_space<vmem>>, vector<16x128xf32>
    %c0_1 = arith.constant 0 : index
    %c0_2 = arith.constant 0 : index
    %1 = vector.load %arg1[%c0_1, %c0_2] : memref<648x128xf32, #tpu.memory_space<vmem>>, vector<128x128xf32>
    %cst = arith.constant dense<0.000000e+00> : vector<16x128xf32>
    %2 = tpu.matmul %0, %1, %cst {dimension_numbers = #tpu.dot_dimension_numbers<[1], [0], [0], [1], [0, 0, 1, 1], [], []>} : vector<16x128xf32>, vector<128x128xf32>, vector<16x128xf32> -> vector<16x128xf32>
    %c640 = arith.constant 640 : index
    %c0_3 = arith.constant 0 : index
    %3 = vector.load %arg1[%c640, %c0_3] : memref<648x128xf32, #tpu.memory_space<vmem>>, vector<1x128xf32>
    %4 = vector.broadcast %3 : vector<1x128xf32> to vector<16x128xf32>
    %5 = arith.addf %2, %4 : vector<16x128xf32>
    %cst_4 = arith.constant 0.000000e+00 : f32
    %6 = vector.broadcast %cst_4 : f32 to vector<16x128xf32>
    %7 = arith.cmpf ogt, %5, %6 : vector<16x128xf32>
    %8 = math.exp %5 : vector<16x128xf32>
    %cst_5 = arith.constant 1.000000e+00 : f32
    %9 = vector.broadcast %cst_5 : f32 to vector<16x128xf32>
    %10 = arith.subf %8, %9 : vector<16x128xf32>
    %cst_6 = arith.constant 1.67326319 : f32
    %11 = vector.broadcast %cst_6 : f32 to vector<16x128xf32>
    %12 = arith.mulf %11, %10 : vector<16x128xf32>
    %13 = arith.select %7, %5, %12 : vector<16x128xi1>, vector<16x128xf32>
    %cst_7 = arith.constant 1.05070102 : f32
    %14 = vector.broadcast %cst_7 : f32 to vector<16x128xf32>
    %15 = arith.mulf %14, %13 : vector<16x128xf32>
    %cst_8 = arith.constant dense<0.000000e+00> : vector<16xf32>
    %16 = vector.multi_reduction <add>, %15, %cst_8 [1] : vector<16x128xf32> to vector<16xf32>
    %17 = vector.shape_cast %16 : vector<16xf32> to vector<16x1xf32>
    %18 = arith.mulf %15, %15 : vector<16x128xf32>
    %cst_9 = arith.constant dense<0.000000e+00> : vector<16xf32>
    %19 = vector.multi_reduction <add>, %18, %cst_9 [1] : vector<16x128xf32> to vector<16xf32>
    %20 = vector.shape_cast %19 : vector<16xf32> to vector<16x1xf32>
    %cst_10 = arith.constant 3.125000e-02 : f32
    %21 = vector.broadcast %cst_10 : f32 to vector<16x1xf32>
    %22 = arith.mulf %17, %21 : vector<16x1xf32>
    %cst_11 = arith.constant 3.125000e-02 : f32
    %23 = vector.broadcast %cst_11 : f32 to vector<16x1xf32>
    %24 = arith.mulf %20, %23 : vector<16x1xf32>
    %25 = arith.mulf %22, %22 : vector<16x1xf32>
    %26 = arith.subf %24, %25 : vector<16x1xf32>
    %cst_12 = arith.constant 0.000000e+00 : f32
    %27 = vector.broadcast %cst_12 : f32 to vector<16x1xf32>
    %28 = arith.maximumf %26, %27 : vector<16x1xf32>
    %29 = vector.broadcast %22 : vector<16x1xf32> to vector<16x128xf32>
    %30 = arith.subf %15, %29 : vector<16x128xf32>
    %cst_13 = arith.constant 9.99999974E-6 : f32
    %31 = vector.broadcast %cst_13 : f32 to vector<16x1xf32>
    %32 = arith.addf %28, %31 : vector<16x1xf32>
    %33 = math.rsqrt %32 : vector<16x1xf32>
    %34 = vector.broadcast %33 : vector<16x1xf32> to vector<16x128xf32>
    %35 = arith.mulf %30, %34 : vector<16x128xf32>
    %c128 = arith.constant 128 : index
    %c0_14 = arith.constant 0 : index
    %36 = vector.load %arg1[%c128, %c0_14] : memref<648x128xf32, #tpu.memory_space<vmem>>, vector<128x128xf32>
    %cst_15 = arith.constant dense<0.000000e+00> : vector<16x128xf32>
    %37 = tpu.matmul %35, %36, %cst_15 {dimension_numbers = #tpu.dot_dimension_numbers<[1], [0], [0], [1], [0, 0, 1, 1], [], []>} : vector<16x128xf32>, vector<128x128xf32>, vector<16x128xf32> -> vector<16x128xf32>
    %c641 = arith.constant 641 : index
    %c0_16 = arith.constant 0 : index
    %38 = vector.load %arg1[%c641, %c0_16] : memref<648x128xf32, #tpu.memory_space<vmem>>, vector<1x128xf32>
    %39 = vector.broadcast %38 : vector<1x128xf32> to vector<16x128xf32>
    %40 = arith.addf %37, %39 : vector<16x128xf32>
    %cst_17 = arith.constant 0.000000e+00 : f32
    %41 = vector.broadcast %cst_17 : f32 to vector<16x128xf32>
    %42 = arith.cmpf ogt, %40, %41 : vector<16x128xf32>
    %43 = math.exp %40 : vector<16x128xf32>
    %cst_18 = arith.constant 1.000000e+00 : f32
    %44 = vector.broadcast %cst_18 : f32 to vector<16x128xf32>
    %45 = arith.subf %43, %44 : vector<16x128xf32>
    %cst_19 = arith.constant 1.67326319 : f32
    %46 = vector.broadcast %cst_19 : f32 to vector<16x128xf32>
    %47 = arith.mulf %46, %45 : vector<16x128xf32>
    %48 = arith.select %42, %40, %47 : vector<16x128xi1>, vector<16x128xf32>
    %cst_20 = arith.constant 1.05070102 : f32
    %49 = vector.broadcast %cst_20 : f32 to vector<16x128xf32>
    %50 = arith.mulf %49, %48 : vector<16x128xf32>
    %51 = arith.addf %50, %15 : vector<16x128xf32>
    %cst_21 = arith.constant dense<0.000000e+00> : vector<16xf32>
    %52 = vector.multi_reduction <add>, %51, %cst_21 [1] : vector<16x128xf32> to vector<16xf32>
    %53 = vector.shape_cast %52 : vector<16xf32> to vector<16x1xf32>
    %54 = arith.mulf %51, %51 : vector<16x128xf32>
    %cst_22 = arith.constant dense<0.000000e+00> : vector<16xf32>
    %55 = vector.multi_reduction <add>, %54, %cst_22 [1] : vector<16x128xf32> to vector<16xf32>
    %56 = vector.shape_cast %55 : vector<16xf32> to vector<16x1xf32>
    %cst_23 = arith.constant 3.125000e-02 : f32
    %57 = vector.broadcast %cst_23 : f32 to vector<16x1xf32>
    %58 = arith.mulf %53, %57 : vector<16x1xf32>
    %cst_24 = arith.constant 3.125000e-02 : f32
    %59 = vector.broadcast %cst_24 : f32 to vector<16x1xf32>
    %60 = arith.mulf %56, %59 : vector<16x1xf32>
    %61 = arith.mulf %58, %58 : vector<16x1xf32>
    %62 = arith.subf %60, %61 : vector<16x1xf32>
    %cst_25 = arith.constant 0.000000e+00 : f32
    %63 = vector.broadcast %cst_25 : f32 to vector<16x1xf32>
    %64 = arith.maximumf %62, %63 : vector<16x1xf32>
    %65 = vector.broadcast %58 : vector<16x1xf32> to vector<16x128xf32>
    %66 = arith.subf %51, %65 : vector<16x128xf32>
    %cst_26 = arith.constant 9.99999974E-6 : f32
    %67 = vector.broadcast %cst_26 : f32 to vector<16x1xf32>
    %68 = arith.addf %64, %67 : vector<16x1xf32>
    %69 = math.rsqrt %68 : vector<16x1xf32>
    %70 = vector.broadcast %69 : vector<16x1xf32> to vector<16x128xf32>
    %71 = arith.mulf %66, %70 : vector<16x128xf32>
    %c256 = arith.constant 256 : index
    %c0_27 = arith.constant 0 : index
    %72 = vector.load %arg1[%c256, %c0_27] : memref<648x128xf32, #tpu.memory_space<vmem>>, vector<128x128xf32>
    %cst_28 = arith.constant dense<0.000000e+00> : vector<16x128xf32>
    %73 = tpu.matmul %71, %72, %cst_28 {dimension_numbers = #tpu.dot_dimension_numbers<[1], [0], [0], [1], [0, 0, 1, 1], [], []>} : vector<16x128xf32>, vector<128x128xf32>, vector<16x128xf32> -> vector<16x128xf32>
    %c642 = arith.constant 642 : index
    %c0_29 = arith.constant 0 : index
    %74 = vector.load %arg1[%c642, %c0_29] : memref<648x128xf32, #tpu.memory_space<vmem>>, vector<1x128xf32>
    %75 = vector.broadcast %74 : vector<1x128xf32> to vector<16x128xf32>
    %76 = arith.addf %73, %75 : vector<16x128xf32>
    %cst_30 = arith.constant 0.000000e+00 : f32
    %77 = vector.broadcast %cst_30 : f32 to vector<16x128xf32>
    %78 = arith.cmpf ogt, %76, %77 : vector<16x128xf32>
    %79 = math.exp %76 : vector<16x128xf32>
    %cst_31 = arith.constant 1.000000e+00 : f32
    %80 = vector.broadcast %cst_31 : f32 to vector<16x128xf32>
    %81 = arith.subf %79, %80 : vector<16x128xf32>
    %cst_32 = arith.constant 1.67326319 : f32
    %82 = vector.broadcast %cst_32 : f32 to vector<16x128xf32>
    %83 = arith.mulf %82, %81 : vector<16x128xf32>
    %84 = arith.select %78, %76, %83 : vector<16x128xi1>, vector<16x128xf32>
    %cst_33 = arith.constant 1.05070102 : f32
    %85 = vector.broadcast %cst_33 : f32 to vector<16x128xf32>
    %86 = arith.mulf %85, %84 : vector<16x128xf32>
    %87 = arith.addf %86, %51 : vector<16x128xf32>
    %c384 = arith.constant 384 : index
    %c0_34 = arith.constant 0 : index
    %88 = vector.load %arg1[%c384, %c0_34] : memref<648x128xf32, #tpu.memory_space<vmem>>, vector<128x128xf32>
    %cst_35 = arith.constant dense<0.000000e+00> : vector<16x128xf32>
    %89 = tpu.matmul %87, %88, %cst_35 {dimension_numbers = #tpu.dot_dimension_numbers<[1], [0], [0], [1], [0, 0, 1, 1], [], []>} : vector<16x128xf32>, vector<128x128xf32>, vector<16x128xf32> -> vector<16x128xf32>
    %c643 = arith.constant 643 : index
    %c0_36 = arith.constant 0 : index
    %90 = vector.load %arg1[%c643, %c0_36] : memref<648x128xf32, #tpu.memory_space<vmem>>, vector<1x128xf32>
    %91 = vector.broadcast %90 : vector<1x128xf32> to vector<16x128xf32>
    %92 = arith.addf %89, %91 : vector<16x128xf32>
    %cst_37 = arith.constant dense<0.000000e+00> : vector<16xf32>
    %93 = vector.multi_reduction <add>, %92, %cst_37 [1] : vector<16x128xf32> to vector<16xf32>
    %94 = vector.shape_cast %93 : vector<16xf32> to vector<16x1xf32>
    %95 = arith.mulf %92, %92 : vector<16x128xf32>
    %cst_38 = arith.constant dense<0.000000e+00> : vector<16xf32>
    %96 = vector.multi_reduction <add>, %95, %cst_38 [1] : vector<16x128xf32> to vector<16xf32>
    %97 = vector.shape_cast %96 : vector<16xf32> to vector<16x1xf32>
    %cst_39 = arith.constant 3.125000e-02 : f32
    %98 = vector.broadcast %cst_39 : f32 to vector<16x1xf32>
    %99 = arith.mulf %94, %98 : vector<16x1xf32>
    %cst_40 = arith.constant 3.125000e-02 : f32
    %100 = vector.broadcast %cst_40 : f32 to vector<16x1xf32>
    %101 = arith.mulf %97, %100 : vector<16x1xf32>
    %102 = arith.mulf %99, %99 : vector<16x1xf32>
    %103 = arith.subf %101, %102 : vector<16x1xf32>
    %cst_41 = arith.constant 0.000000e+00 : f32
    %104 = vector.broadcast %cst_41 : f32 to vector<16x1xf32>
    %105 = arith.maximumf %103, %104 : vector<16x1xf32>
    %106 = vector.broadcast %99 : vector<16x1xf32> to vector<16x128xf32>
    %107 = arith.subf %92, %106 : vector<16x128xf32>
    %cst_42 = arith.constant 9.99999974E-6 : f32
    %108 = vector.broadcast %cst_42 : f32 to vector<16x1xf32>
    %109 = arith.addf %105, %108 : vector<16x1xf32>
    %110 = math.rsqrt %109 : vector<16x1xf32>
    %111 = vector.broadcast %110 : vector<16x1xf32> to vector<16x128xf32>
    %112 = arith.mulf %107, %111 : vector<16x128xf32>
    %c644 = arith.constant 644 : index
    %c0_43 = arith.constant 0 : index
    %113 = vector.load %arg1[%c644, %c0_43] : memref<648x128xf32, #tpu.memory_space<vmem>>, vector<1x128xf32>
    %114 = vector.broadcast %113 : vector<1x128xf32> to vector<16x128xf32>
    %115 = arith.mulf %112, %114 : vector<16x128xf32>
    %c645 = arith.constant 645 : index
    %c0_44 = arith.constant 0 : index
    %116 = vector.load %arg1[%c645, %c0_44] : memref<648x128xf32, #tpu.memory_space<vmem>>, vector<1x128xf32>
    %117 = vector.broadcast %116 : vector<1x128xf32> to vector<16x128xf32>
    %118 = arith.addf %115, %117 : vector<16x128xf32>
    %c512 = arith.constant 512 : index
    %c0_45 = arith.constant 0 : index
    %119 = vector.load %arg1[%c512, %c0_45] : memref<648x128xf32, #tpu.memory_space<vmem>>, vector<128x128xf32>
    %cst_46 = arith.constant dense<0.000000e+00> : vector<16x128xf32>
    %120 = tpu.matmul %118, %119, %cst_46 {dimension_numbers = #tpu.dot_dimension_numbers<[1], [0], [0], [1], [0, 0, 1, 1], [], []>} : vector<16x128xf32>, vector<128x128xf32>, vector<16x128xf32> -> vector<16x128xf32>
    %c646 = arith.constant 646 : index
    %c0_47 = arith.constant 0 : index
    %121 = vector.load %arg1[%c646, %c0_47] : memref<648x128xf32, #tpu.memory_space<vmem>>, vector<1x128xf32>
    %122 = vector.broadcast %121 : vector<1x128xf32> to vector<16x128xf32>
    %123 = arith.addf %120, %122 : vector<16x128xf32>
    %124 = arith.addf %118, %123 : vector<16x128xf32>
    %c0_48 = arith.constant 0 : index
    %c0_49 = arith.constant 0 : index
    %125 = vector.load %arg2[%c0_48, %c0_49] : memref<16x128xf32, #tpu.memory_space<vmem>>, vector<16x128xf32>
    tpu.vector_store %arg2[%c0_48, %c0_49], %124 {strides = array<i32>} : memref<16x128xf32, #tpu.memory_space<vmem>>, vector<16x128xf32>,
    return
  }
}

</mosaic_0001>

<llo_original>
// kernel: single_snapshot_net.1
$region0: #{single_snapshot_net.1}
  #allocation0 [shape = 'u32[]', space=smem, size = 0x4, offset = 0x4, fixed_abs, tag = 'smem constant byte address 0x4 - core index']
  #allocation1 [shape = 'u32[72,128]{1,0:T(1,128)}', space=vmem, size = 0x9000, scoped, tag = 'internal scratch']
  %s0 = inlined_call_operand.vmem [shape: f32[16,128], index: 0, kind: input, shape index: {}]
  %s1 = inlined_call_operand.hbm [shape: f32[648,128], index: 1, kind: input, shape index: {}]
  %s2 = inlined_call_operand.vmem [shape: f32[16,128], index: 2, kind: output, shape index: {}]
  %s3 = sld [smem:[#allocation0]]
  $region22: #{single_snapshot_net.1} parent=0
    _
  %s5 = ssub.s32 1, %s3
  %s6 = scalar_select 0, %s5, %s3
  $region1: #{single_snapshot_net.1} parent=0
    #allocation2 [shape = 'u8[331776]{0}', space=vmem, size = 0x51000, scoped, tag = 'input window, operand 1, single buffered']
    #allocation3 [shape = 's32[1]{0}', space=sflag, size = 0x4, scoped, tag = 'scoped memory for single_snapshot_net.1']
    %7 = vsyncpa [#allocation3], 0
    // Predicated region
    $region2: #{single_snapshot_net.1} parent=1 // pred_check
      _
    $region3: #{single_snapshot_net.1} parent=1 // pred_check_branch
      %9 = sbr.rel (0) target = $region5
    $region4: #{single_snapshot_net.1} parent=1 // pred_region
      _
    $region5: #{single_snapshot_net.1} parent=1 // pred_fallthru
      _
    // Predicated region
    $region6: #{single_snapshot_net.1} parent=1 // pred_check
      _
    $region7: #{single_snapshot_net.1} parent=1 // pred_check_branch
      %11 = sbr.rel (0) target = $region9
    $region8: #{single_snapshot_net.1} parent=1 // pred_region
      %13 = vsyncadd [#allocation3], 0
      %s14 = sshll.u32 %s1, 4
      %s15 = int_to_ptr.hbm [resolvable:$true] %s14
      %s16 = sshll.u32 [#allocation2], 4
      %s17 = int_to_ptr.vmem [resolvable:$true] %s16
      %22 = dma.hbm_to_vmem [thread:$0]  %s15, 10368, %s17, [#allocation3], 128, 128, 8
    $region9: #{single_snapshot_net.1} parent=1 // pred_fallthru
      _
    // Predicated region
    $region10: #{single_snapshot_net.1} parent=1 // pred_check
      _
    $region11: #{single_snapshot_net.1} parent=1 // pred_check_branch
      %24 = sbr.rel (0) target = $region13
    $region12: #{single_snapshot_net.1} parent=1 // pred_region
      %26 = dma.done [#allocation3], 10368
    $region13: #{single_snapshot_net.1} parent=1 // pred_fallthru
      _
    %v27 = vld [vmem:[%s0] sm:$0xff]
    %v28 = vld [vmem:[%s0 + $0x8] sm:$0xff]
    %v29 = vld [vmem:[#allocation2] sm:$0xff]
    %v30 = vld [vmem:[#allocation2 + $0x8] sm:$0xff]
    %v31 = vld [vmem:[#allocation2 + $0x10] sm:$0xff]
    %v32 = vld [vmem:[#allocation2 + $0x18] sm:$0xff]
    %v33 = vld [vmem:[#allocation2 + $0x20] sm:$0xff]
    %v34 = vld [vmem:[#allocation2 + $0x28] sm:$0xff]
    %v35 = vld [vmem:[#allocation2 + $0x30] sm:$0xff]
    %v36 = vld [vmem:[#allocation2 + $0x38] sm:$0xff]
    %v37 = vld [vmem:[#allocation2 + $0x40] sm:$0xff]
    %v38 = vld [vmem:[#allocation2 + $0x48] sm:$0xff]
    %v39 = vld [vmem:[#allocation2 + $0x50] sm:$0xff]
    %v40 = vld [vmem:[#allocation2 + $0x58] sm:$0xff]
    %v41 = vld [vmem:[#allocation2 + $0x60] sm:$0xff]
    %v42 = vld [vmem:[#allocation2 + $0x68] sm:$0xff]
    %v43 = vld [vmem:[#allocation2 + $0x70] sm:$0xff]
    %v44 = vld [vmem:[#allocation2 + $0x78] sm:$0xff]
    %v45 = vld [vmem:[#allocation2 + $0x280] sm:$0x1]
    %v46 = vperm.slane %v45, 0
    %47 = vmatpush.msra.mxu0 %v44
    %48 = vmatpush.msra.mxu0 %v43
    %49 = vmatpush.msra.mxu0 %v42
    %50 = vmatpush.msra.mxu0 %v41
    %51 = vmatpush.msra.mxu0 %v40
    %52 = vmatpush.msra.mxu0 %v39
    %53 = vmatpush.msra.mxu0 %v38
    %54 = vmatpush.msra.mxu0 %v37
    %55 = vmatpush.msra.mxu0 %v36
    %56 = vmatpush.msra.mxu0 %v35
    %57 = vmatpush.msra.mxu0 %v34
    %58 = vmatpush.msra.mxu0 %v33
    %59 = vmatpush.msra.mxu0 %v32
    %60 = vmatpush.msra.mxu0 %v31
    %61 = vmatpush.msra.mxu0 %v30
    %62 = vmatpush.msra.mxu0 %v29
    %63 = vmatmul.f32.gmra.mxu0 %v27
    %v64 = vpop.f32.mrf.mxu0
    %v65 = vadd.f32 %v46, %v64
    %66 = vmatmul.f32.gmra.mxu0 %v28
    %v67 = vpop.f32.mrf.mxu0
    %v68 = vadd.f32 %v46, %v67
    %69 = vdwg.mxu0
    %vm70 = vcmp.gt.f32.partialorder %v65, 0.0
    %vm71 = vcmp.gt.f32.partialorder %v68, 0.0
    %v72 = vmul.f32 %v65, 1.442695
    %v73 = vpow.pop %v72
    %v74 = vmul.f32 %v68, 1.442695
    %v75 = vpow.pop %v74
    %v76 = vsub.f32 %v73, 1.0
    %v77 = vsub.f32 %v75, 1.0
    %v78 = vmul.f32 %v76, 1.6732632
    %v79 = vmul.f32 %v77, 1.6732632
    %v80 = vsel %vm70, %v65, %v78
    %v81 = vsel %vm71, %v68, %v79
    %v82 = vmul.f32 %v80, 1.050701
    %v83 = vmul.f32 %v81, 1.050701
    %84 = vadd.xlane.f32.xlu0 %v82
    %v85 = vpop.xlane.xlu0 %84
    %86 = vadd.xlane.f32.xlu0 %v83
    %v87 = vpop.xlane.xlu0 %86
    %v88 = vmul.f32 %v82, %v82
    %v89 = vmul.f32 %v83, %v83
    %90 = vadd.xlane.f32.xlu0 %v88
    %v91 = vpop.xlane.xlu0 %90
    %92 = vadd.xlane.f32.xlu0 %v89
    %v93 = vpop.xlane.xlu0 %92
    %v94 = vmul.f32 %v85, 0.03125
    %v95 = vmul.f32 %v87, 0.03125
    %v96 = vmul.f32 %v91, 0.03125
    %v97 = vmul.f32 %v93, 0.03125
    %v98 = vmul.f32 %v94, %v94
    %v99 = vmul.f32 %v95, %v95
    %v100 = vsub.f32 %v96, %v98
    %v101 = vsub.f32 %v97, %v99
    %v102 = vmax.f32 %v100, 0.0
    %v103 = vmax.f32 %v101, 0.0
    %v104 = vsub.f32 %v82, %v94
    %v105 = vsub.f32 %v83, %v95
    %v106 = vadd.f32 %v102, 1e-05
    %v107 = vadd.f32 %v103, 1e-05
    %v108 = vrsqrt.pop %v106
    %v109 = vmul.f32 %v108, %v106
    %v110 = vmul.f32 %v109, %v108
    %v111 = vmul.f32 0.5, %v110
    %v112 = vsub.f32 1.5, %v111
    %v113 = vmul.f32 %v108, %v112
    %vm114 = vweird.f32 %v106
    %vm115 = vweird.f32 %v108
    %vm116 = vmor %vm114, %vm115
    %v117 = vsel %vm116, %v108, %v113
    %v118 = vrsqrt.pop %v107
    %v119 = vmul.f32 %v118, %v107
    %v120 = vmul.f32 %v119, %v118
    %v121 = vmul.f32 0.5, %v120
    %v122 = vsub.f32 1.5, %v121
    %v123 = vmul.f32 %v118, %v122
    %vm124 = vweird.f32 %v107
    %vm125 = vweird.f32 %v118
    %vm126 = vmor %vm124, %vm125
    %v127 = vsel %vm126, %v118, %v123
    %v128 = vmul.f32 %v104, %v117
    %v129 = vmul.f32 %v105, %v127
    %v130 = vld [vmem:[#allocation2 + $0x80] sm:$0xff]
    %v131 = vld [vmem:[#allocation2 + $0x88] sm:$0xff]
    %v132 = vld [vmem:[#allocation2 + $0x90] sm:$0xff]
    %v133 = vld [vmem:[#allocation2 + $0x98] sm:$0xff]
    %v134 = vld [vmem:[#allocation2 + $0xa0] sm:$0xff]
    %v135 = vld [vmem:[#allocation2 + $0xa8] sm:$0xff]
    %v136 = vld [vmem:[#allocation2 + $0xb0] sm:$0xff]
    %v137 = vld [vmem:[#allocation2 + $0xb8] sm:$0xff]
    %v138 = vld [vmem:[#allocation2 + $0xc0] sm:$0xff]
    %v139 = vld [vmem:[#allocation2 + $0xc8] sm:$0xff]
    %v140 = vld [vmem:[#allocation2 + $0xd0] sm:$0xff]
    %v141 = vld [vmem:[#allocation2 + $0xd8] sm:$0xff]
    %v142 = vld [vmem:[#allocation2 + $0xe0] sm:$0xff]
    %v143 = vld [vmem:[#allocation2 + $0xe8] sm:$0xff]
    %v144 = vld [vmem:[#allocation2 + $0xf0] sm:$0xff]
    %v145 = vld [vmem:[#allocation2 + $0xf8] sm:$0xff]
    %v146 = vld [vmem:[#allocation2 + $0x281] sm:$0x1]
    %v147 = vperm.slane %v146, 0
    %148 = vmatpush.msra.mxu0 %v145
    %149 = vmatpush.msra.mxu0 %v144
    %150 = vmatpush.msra.mxu0 %v143
    %151 = vmatpush.msra.mxu0 %v142
    %152 = vmatpush.msra.mxu0 %v141
    %153 = vmatpush.msra.mxu0 %v140
    %154 = vmatpush.msra.mxu0 %v139
    %155 = vmatpush.msra.mxu0 %v138
    %156 = vmatpush.msra.mxu0 %v137
    %157 = vmatpush.msra.mxu0 %v136
    %158 = vmatpush.msra.mxu0 %v135
    %159 = vmatpush.msra.mxu0 %v134
    %160 = vmatpush.msra.mxu0 %v133
    %161 = vmatpush.msra.mxu0 %v132
    %162 = vmatpush.msra.mxu0 %v131
    %163 = vmatpush.msra.mxu0 %v130
    %164 = vmatmul.f32.gmra.mxu0 %v128
    %v165 = vpop.f32.mrf.mxu0
    %v166 = vadd.f32 %v147, %v165
    %167 = vmatmul.f32.gmra.mxu0 %v129
    %v168 = vpop.f32.mrf.mxu0
    %v169 = vadd.f32 %v147, %v168
    %170 = vdwg.mxu0
    %vm171 = vcmp.gt.f32.partialorder %v166, 0.0
    %vm172 = vcmp.gt.f32.partialorder %v169, 0.0
    %v173 = vmul.f32 %v166, 1.442695
    %v174 = vpow.pop %v173
    %v175 = vmul.f32 %v169, 1.442695
    %v176 = vpow.pop %v175
    %v177 = vsub.f32 %v174, 1.0
    %v178 = vsub.f32 %v176, 1.0
    %v179 = vmul.f32 %v177, 1.6732632
    %v180 = vmul.f32 %v178, 1.6732632
    %v181 = vsel %vm171, %v166, %v179
    %v182 = vsel %vm172, %v169, %v180
    %v183 = vmul.f32 %v181, 1.050701
    %v184 = vmul.f32 %v182, 1.050701
    %v185 = vadd.f32 %v183, %v82
    %v186 = vadd.f32 %v184, %v83
    %187 = vadd.xlane.f32.xlu0 %v185
    %v188 = vpop.xlane.xlu0 %187
    %189 = vadd.xlane.f32.xlu0 %v186
    %v190 = vpop.xlane.xlu0 %189
    %v191 = vmul.f32 %v185, %v185
    %v192 = vmul.f32 %v186, %v186
    %193 = vadd.xlane.f32.xlu0 %v191
    %v194 = vpop.xlane.xlu0 %193
    %195 = vadd.xlane.f32.xlu0 %v192
    %v196 = vpop.xlane.xlu0 %195
    %v197 = vmul.f32 %v188, 0.03125
    %v198 = vmul.f32 %v190, 0.03125
    %v199 = vmul.f32 %v194, 0.03125
    %v200 = vmul.f32 %v196, 0.03125
    %v201 = vmul.f32 %v197, %v197
    %v202 = vmul.f32 %v198, %v198
    %v203 = vsub.f32 %v199, %v201
    %v204 = vsub.f32 %v200, %v202
    %v205 = vmax.f32 %v203, 0.0
    %v206 = vmax.f32 %v204, 0.0
    %v207 = vsub.f32 %v185, %v197
    %v208 = vsub.f32 %v186, %v198
    %v209 = vadd.f32 %v205, 1e-05
    %v210 = vadd.f32 %v206, 1e-05
    %v211 = vrsqrt.pop %v209
    %v212 = vmul.f32 %v211, %v209
    %v213 = vmul.f32 %v212, %v211
    %v214 = vmul.f32 0.5, %v213
    %v215 = vsub.f32 1.5, %v214
    %v216 = vmul.f32 %v211, %v215
    %vm217 = vweird.f32 %v209
    %vm218 = vweird.f32 %v211
    %vm219 = vmor %vm217, %vm218
    %v220 = vsel %vm219, %v211, %v216
    %v221 = vrsqrt.pop %v210
    %v222 = vmul.f32 %v221, %v210
    %v223 = vmul.f32 %v222, %v221
    %v224 = vmul.f32 0.5, %v223
    %v225 = vsub.f32 1.5, %v224
    %v226 = vmul.f32 %v221, %v225
    %vm227 = vweird.f32 %v210
    %vm228 = vweird.f32 %v221
    %vm229 = vmor %vm227, %vm228
    %v230 = vsel %vm229, %v221, %v226
    %v231 = vmul.f32 %v207, %v220
    %v232 = vmul.f32 %v208, %v230
    %v233 = vld [vmem:[#allocation2 + $0x100] sm:$0xff]
    %v234 = vld [vmem:[#allocation2 + $0x108] sm:$0xff]
    %v235 = vld [vmem:[#allocation2 + $0x110] sm:$0xff]
    %v236 = vld [vmem:[#allocation2 + $0x118] sm:$0xff]
    %v237 = vld [vmem:[#allocation2 + $0x120] sm:$0xff]
    %v238 = vld [vmem:[#allocation2 + $0x128] sm:$0xff]
    %v239 = vld [vmem:[#allocation2 + $0x130] sm:$0xff]
    %v240 = vld [vmem:[#allocation2 + $0x138] sm:$0xff]
    %v241 = vld [vmem:[#allocation2 + $0x140] sm:$0xff]
    %v242 = vld [vmem:[#allocation2 + $0x148] sm:$0xff]
    %v243 = vld [vmem:[#allocation2 + $0x150] sm:$0xff]
    %v244 = vld [vmem:[#allocation2 + $0x158] sm:$0xff]
    %v245 = vld [vmem:[#allocation2 + $0x160] sm:$0xff]
    %v246 = vld [vmem:[#allocation2 + $0x168] sm:$0xff]
    %v247 = vld [vmem:[#allocation2 + $0x170] sm:$0xff]
    %v248 = vld [vmem:[#allocation2 + $0x178] sm:$0xff]
    %v249 = vld [vmem:[#allocation2 + $0x282] sm:$0x1]
    %v250 = vperm.slane %v249, 0
    %251 = vmatpush.msra.mxu0 %v248
    %252 = vmatpush.msra.mxu0 %v247
    %253 = vmatpush.msra.mxu0 %v246
    %254 = vmatpush.msra.mxu0 %v245
    %255 = vmatpush.msra.mxu0 %v244
    %256 = vmatpush.msra.mxu0 %v243
    %257 = vmatpush.msra.mxu0 %v242
    %258 = vmatpush.msra.mxu0 %v241
    %259 = vmatpush.msra.mxu0 %v240
    %260 = vmatpush.msra.mxu0 %v239
    %261 = vmatpush.msra.mxu0 %v238
    %262 = vmatpush.msra.mxu0 %v237
    %263 = vmatpush.msra.mxu0 %v236
    %264 = vmatpush.msra.mxu0 %v235
    %265 = vmatpush.msra.mxu0 %v234
    %266 = vmatpush.msra.mxu0 %v233
    %267 = vmatmul.f32.gmra.mxu0 %v231
    %v268 = vpop.f32.mrf.mxu0
    %v269 = vadd.f32 %v250, %v268
    %270 = vmatmul.f32.gmra.mxu0 %v232
    %v271 = vpop.f32.mrf.mxu0
    %v272 = vadd.f32 %v250, %v271
    %273 = vdwg.mxu0
    %vm274 = vcmp.gt.f32.partialorder %v269, 0.0
    %vm275 = vcmp.gt.f32.partialorder %v272, 0.0
    %v276 = vmul.f32 %v269, 1.442695
    %v277 = vpow.pop %v276
    %v278 = vmul.f32 %v272, 1.442695
    %v279 = vpow.pop %v278
    %v280 = vsub.f32 %v277, 1.0
    %v281 = vsub.f32 %v279, 1.0
    %v282 = vmul.f32 %v280, 1.6732632
    %v283 = vmul.f32 %v281, 1.6732632
    %v284 = vsel %vm274, %v269, %v282
    %v285 = vsel %vm275, %v272, %v283
    %v286 = vmul.f32 %v284, 1.050701
    %v287 = vmul.f32 %v285, 1.050701
    %v288 = vadd.f32 %v286, %v185
    %v289 = vadd.f32 %v287, %v186
    %v290 = vld [vmem:[#allocation2 + $0x180] sm:$0xff]
    %v291 = vld [vmem:[#allocation2 + $0x188] sm:$0xff]
    %v292 = vld [vmem:[#allocation2 + $0x190] sm:$0xff]
    %v293 = vld [vmem:[#allocation2 + $0x198] sm:$0xff]
    %v294 = vld [vmem:[#allocation2 + $0x1a0] sm:$0xff]
    %v295 = vld [vmem:[#allocation2 + $0x1a8] sm:$0xff]
    %v296 = vld [vmem:[#allocation2 + $0x1b0] sm:$0xff]
    %v297 = vld [vmem:[#allocation2 + $0x1b8] sm:$0xff]
    %v298 = vld [vmem:[#allocation2 + $0x1c0] sm:$0xff]
    %v299 = vld [vmem:[#allocation2 + $0x1c8] sm:$0xff]
    %v300 = vld [vmem:[#allocation2 + $0x1d0] sm:$0xff]
    %v301 = vld [vmem:[#allocation2 + $0x1d8] sm:$0xff]
    %v302 = vld [vmem:[#allocation2 + $0x1e0] sm:$0xff]
    %v303 = vld [vmem:[#allocation2 + $0x1e8] sm:$0xff]
    %v304 = vld [vmem:[#allocation2 + $0x1f0] sm:$0xff]
    %v305 = vld [vmem:[#allocation2 + $0x1f8] sm:$0xff]
    %v306 = vld [vmem:[#allocation2 + $0x283] sm:$0x1]
    %v307 = vperm.slane %v306, 0
    %308 = vmatpush.msra.mxu0 %v305
    %309 = vmatpush.msra.mxu0 %v304
    %310 = vmatpush.msra.mxu0 %v303
    %311 = vmatpush.msra.mxu0 %v302
    %312 = vmatpush.msra.mxu0 %v301
    %313 = vmatpush.msra.mxu0 %v300
    %314 = vmatpush.msra.mxu0 %v299
    %315 = vmatpush.msra.mxu0 %v298
    %316 = vmatpush.msra.mxu0 %v297
    %317 = vmatpush.msra.mxu0 %v296
    %318 = vmatpush.msra.mxu0 %v295
    %319 = vmatpush.msra.mxu0 %v294
    %320 = vmatpush.msra.mxu0 %v293
    %321 = vmatpush.msra.mxu0 %v292
    %322 = vmatpush.msra.mxu0 %v291
    %323 = vmatpush.msra.mxu0 %v290
    %324 = vmatmul.f32.gmra.mxu0 %v288
    %v325 = vpop.f32.mrf.mxu0
    %v326 = vadd.f32 %v307, %v325
    %327 = vmatmul.f32.gmra.mxu0 %v289
    %v328 = vpop.f32.mrf.mxu0
    %v329 = vadd.f32 %v307, %v328
    %330 = vdwg.mxu0
    %331 = vadd.xlane.f32.xlu0 %v326
    %v332 = vpop.xlane.xlu0 %331
    %333 = vadd.xlane.f32.xlu0 %v329
    %v334 = vpop.xlane.xlu0 %333
    %v335 = vmul.f32 %v326, %v326
    %v336 = vmul.f32 %v329, %v329
    %337 = vadd.xlane.f32.xlu0 %v335
    %v338 = vpop.xlane.xlu0 %337
    %339 = vadd.xlane.f32.xlu0 %v336
    %v340 = vpop.xlane.xlu0 %339
    %v341 = vmul.f32 %v332, 0.03125
    %v342 = vmul.f32 %v334, 0.03125
    %v343 = vmul.f32 %v338, 0.03125
    %v344 = vmul.f32 %v340, 0.03125
    %v345 = vmul.f32 %v341, %v341
    %v346 = vmul.f32 %v342, %v342
    %v347 = vsub.f32 %v343, %v345
    %v348 = vsub.f32 %v344, %v346
    %v349 = vmax.f32 %v347, 0.0
    %v350 = vmax.f32 %v348, 0.0
    %v351 = vsub.f32 %v326, %v341
    %v352 = vsub.f32 %v329, %v342
    %v353 = vadd.f32 %v349, 1e-05
    %v354 = vadd.f32 %v350, 1e-05
    %v355 = vrsqrt.pop %v353
    %v356 = vmul.f32 %v355, %v353
    %v357 = vmul.f32 %v356, %v355
    %v358 = vmul.f32 0.5, %v357
    %v359 = vsub.f32 1.5, %v358
    %v360 = vmul.f32 %v355, %v359
    %vm361 = vweird.f32 %v353
    %vm362 = vweird.f32 %v355
    %vm363 = vmor %vm361, %vm362
    %v364 = vsel %vm363, %v355, %v360
    %v365 = vrsqrt.pop %v354
    %v366 = vmul.f32 %v365, %v354
    %v367 = vmul.f32 %v366, %v365
    %v368 = vmul.f32 0.5, %v367
    %v369 = vsub.f32 1.5, %v368
    %v370 = vmul.f32 %v365, %v369
    %vm371 = vweird.f32 %v354
    %vm372 = vweird.f32 %v365
    %vm373 = vmor %vm371, %vm372
    %v374 = vsel %vm373, %v365, %v370
    %v375 = vmul.f32 %v351, %v364
    %v376 = vmul.f32 %v352, %v374
    %v377 = vld [vmem:[#allocation2 + $0x284] sm:$0x1]
    %v378 = vperm.slane %v377, 0
    %v379 = vmul.f32 %v375, %v378
    %v380 = vmul.f32 %v376, %v378
    %v381 = vld [vmem:[#allocation2 + $0x285] sm:$0x1]
    %v382 = vperm.slane %v381, 0
    %v383 = vadd.f32 %v379, %v382
    %v384 = vadd.f32 %v380, %v382
    %v385 = vld [vmem:[#allocation2 + $0x200] sm:$0xff]
    %v386 = vld [vmem:[#allocation2 + $0x208] sm:$0xff]
    %v387 = vld [vmem:[#allocation2 + $0x210] sm:$0xff]
    %v388 = vld [vmem:[#allocation2 + $0x218] sm:$0xff]
    %v389 = vld [vmem:[#allocation2 + $0x220] sm:$0xff]
    %v390 = vld [vmem:[#allocation2 + $0x228] sm:$0xff]
    %v391 = vld [vmem:[#allocation2 + $0x230] sm:$0xff]
    %v392 = vld [vmem:[#allocation2 + $0x238] sm:$0xff]
    %v393 = vld [vmem:[#allocation2 + $0x240] sm:$0xff]
    %v394 = vld [vmem:[#allocation2 + $0x248] sm:$0xff]
    %v395 = vld [vmem:[#allocation2 + $0x250] sm:$0xff]
    %v396 = vld [vmem:[#allocation2 + $0x258] sm:$0xff]
    %v397 = vld [vmem:[#allocation2 + $0x260] sm:$0xff]
    %v398 = vld [vmem:[#allocation2 + $0x268] sm:$0xff]
    %v399 = vld [vmem:[#allocation2 + $0x270] sm:$0xff]
    %v400 = vld [vmem:[#allocation2 + $0x278] sm:$0xff]
    %v401 = vld [vmem:[#allocation2 + $0x286] sm:$0x1]
    %v402 = vperm.slane %v401, 0
    %403 = vmatpush.msra.mxu0 %v400
    %404 = vmatpush.msra.mxu0 %v399
    %405 = vmatpush.msra.mxu0 %v398
    %406 = vmatpush.msra.mxu0 %v397
    %407 = vmatpush.msra.mxu0 %v396
    %408 = vmatpush.msra.mxu0 %v395
    %409 = vmatpush.msra.mxu0 %v394
    %410 = vmatpush.msra.mxu0 %v393
    %411 = vmatpush.msra.mxu0 %v392
    %412 = vmatpush.msra.mxu0 %v391
    %413 = vmatpush.msra.mxu0 %v390
    %414 = vmatpush.msra.mxu0 %v389
    %415 = vmatpush.msra.mxu0 %v388
    %416 = vmatpush.msra.mxu0 %v387
    %417 = vmatpush.msra.mxu0 %v386
    %418 = vmatpush.msra.mxu0 %v385
    %419 = vmatmul.f32.gmra.mxu0 %v383
    %v420 = vpop.f32.mrf.mxu0
    %v421 = vadd.f32 %v402, %v420
    %422 = vmatmul.f32.gmra.mxu0 %v384
    %v423 = vpop.f32.mrf.mxu0
    %v424 = vadd.f32 %v402, %v423
    %425 = vdwg.mxu0
    %v426 = vadd.f32 %v383, %v421
    %v427 = vadd.f32 %v384, %v424
    %428 = vst [vmem:[%s2] sm:$0xff] %v426
    %429 = vst [vmem:[%s2 + $0x8] sm:$0xff] %v427
    // Predicated region
    $region14: #{single_snapshot_net.1} parent=1 // pred_check
      _
    $region15: #{single_snapshot_net.1} parent=1 // pred_check_branch
      %431 = sbr.rel (0) target = $region17
    $region16: #{single_snapshot_net.1} parent=1 // pred_region
      _
    $region17: #{single_snapshot_net.1} parent=1 // pred_fallthru
      _
    // Predicated region
    $region18: #{single_snapshot_net.1} parent=1 // pred_check
      _
    $region19: #{single_snapshot_net.1} parent=1 // pred_check_branch
      %433 = sbr.rel (0) target = $region21
    $region20: #{single_snapshot_net.1} parent=1 // pred_region
      _
    $region21: #{single_snapshot_net.1} parent=1 // pred_fallthru
      _
    %434 = vsyncpa [#allocation3], 1

</llo_original>
